<compile_context>
chip_gen: v6e
topology: v6e:2x2x1
jax: 0.10.0
libtpu: 0.0.40
codegen_flags: <defaults>
</compile_context>

<pallas_src>
import jax
import jax.numpy as jnp
from jax.experimental import pallas as pl
from jax.experimental.pallas import tpu as pltpu

# Deterministic parameters of the synthetic `fn` branch.
GAMMA = 1.5
BETA = -0.25

# Lane-dense layout: last dim is a large multiple of 128 -> unmasked vst.
COLS = 512
# 2048 rows x 512 cols: 4 MiB per f32 buffer, 2 MiB per bf16 buffer.
# Multiple of 16 so bf16 sublane packing stays full.
BLOCK_ROWS = 2048
# in + out, double-buffered = 4 buffers; 4 x 4 MiB = 16 MiB -> 32 MiB limit
# leaves 2x headroom and is valid on v5e/v6e (128 MiB phys) and v7x (64 MiB).
VMEM_LIMIT_BYTES = 32 * 1024 * 1024


def _fn_kernel(x_ref, o_ref):
    """Branchless elementwise fn(x) = GAMMA*x + BETA on one VMEM tile."""
    o_ref[...] = x_ref[...] * GAMMA + BETA


def _apply_fn_impl(x):
    """fn branch over an arbitrary-shape x (traced under jax.jit)."""
    orig_shape = x.shape
    dtype = x.dtype
    total = x.size

    flat = x.reshape(-1)
    rows = total // COLS          # full lane-dense rows
    main = rows * COLS            # elements covered by the kernel
    parts = []

    if rows > 0:
        x2 = flat[:main].reshape(rows, COLS)
        if rows <= BLOCK_ROWS:
            # Small array: one full-extent block (always fits VMEM here).
            block_rows = rows
        else:
            # Large array: fixed block, cdiv grid, last partial block masked
            # by Pallas -> pipelined DMA and bounded VMEM for every shape.
            block_rows = BLOCK_ROWS
        grid = (pl.cdiv(rows, block_rows),)

        out2 = pl.pallas_call(
            _fn_kernel,
            out_shape=jax.ShapeDtypeStruct((rows, COLS), dtype),
            grid_spec=pl.GridSpec(
                grid=grid,
                in_specs=[pl.BlockSpec((block_rows, COLS), lambda i: (i, 0))],
                out_specs=pl.BlockSpec((block_rows, COLS), lambda i: (i, 0)),
            ),
            compiler_params=pltpu.CompilerParams(
                # "parallel" shards the grid across v7x's two TensorCores;
                # it is a no-op on v5e/v6e (single TC).
                dimension_semantics=("parallel",),
                vmem_limit_bytes=VMEM_LIMIT_BYTES,
            ),
        )(x2)
        parts.append(out2.reshape(-1))

    if main < total:
        # <512-element remainder: trivial jnp epilogue (negligible work). Only
        # triggers when total % 512 != 0; costs one extra concat copy then.
        tail = flat[main:]
        parts.append((tail * GAMMA + BETA).astype(dtype))

    out_flat = parts[0] if len(parts) == 1 else jnp.concatenate(parts)
    return out_flat.reshape(orig_shape)


# One executable per input shape/dtype: plumbing + kernel compiled together.
_apply_fn = jax.jit(_apply_fn_impl)


def random_apply(x, u, prob):
    """RandomApply.forward: u is the per-call host-side uniform draw."""
    if u < prob:           # branch decided on the host, like Python random()
        return _apply_fn(x)
    return x               # fn_else == identity: no kernel, no HBM traffic


if __name__ == "__main__":
    key = jax.random.PRNGKey(0)
    k_x, k_u = jax.random.split(key)

    x = jax.random.normal(k_x, (2, 4, 16, 16), dtype=jnp.float32)
    prob = 0.5
    # One uniform draw per forward call, mirroring Python's random().
    # (Host sync is intentional: matches PyTorch's per-call semantics.)
    u = float(jax.random.uniform(k_u, ()))

    # 1) Module-faithful call (whichever branch u selects).
    out = jax.block_until_ready(random_apply(x, u, prob))
    expected = x * GAMMA + BETA if u < prob else x
    assert out.shape == x.shape and out.dtype == x.dtype
    assert jnp.allclose(out, expected, atol=1e-6)

    # 2) Force the fn branch so the Pallas kernel is exercised at least once.
    out_fn = jax.block_until_ready(random_apply(x, 0.0, prob))
    assert jnp.allclose(out_fn, x * GAMMA + BETA, atol=1e-6)

    # 3) bf16 end-to-end (no forced f32 upcast in the kernel data path).
    xb = x.astype(jnp.bfloat16)
    out_bf = jax.block_until_ready(random_apply(xb, 0.0, prob))
    assert out_bf.dtype == jnp.bfloat16
    assert jnp.allclose(out_bf.astype(jnp.float32),
                        (xb * GAMMA + BETA).astype(jnp.float32), atol=3e-2)

    # 4) Odd sizes: remainder-only (total < 512) and kernel+remainder paths.
    x_small = jax.random.normal(k_x, (3, 5, 7), dtype=jnp.float32)   # 105 elems
    out_small = jax.block_until_ready(random_apply(x_small, 0.0, prob))
    assert jnp.allclose(out_small, x_small * GAMMA + BETA, atol=1e-6)

    x_mix = jax.random.normal(k_u, (3, 700), dtype=jnp.float32)      # 2100 elems
    out_mix = jax.block_until_ready(random_apply(x_mix, 0.0, prob))
    assert out_mix.shape == x_mix.shape
    assert jnp.allclose(out_mix, x_mix * GAMMA + BETA, atol=1e-6)

    print("KERNEL_OK")
</pallas_src>

<mosaic_0001>
module attributes {stable_mosaic.version = 11 : i64} {
  func.func @_fn_kernel(%arg0: i32, %arg1: memref<4x512xf32, #tpu.memory_space<vmem>>, %arg2: memref<4x512xf32, #tpu.memory_space<vmem>>) attributes {dimension_semantics = [#tpu.dimension_semantics<parallel>], iteration_bounds = array<i64: 1>, scalar_prefetch = 0 : i64, scratch_operands = 0 : i64, tpu.core_type = #tpu.core_type<tc>, window_params = [{transform_indices = @transform_0, window_bounds = array<i64: 4, 512>}, {transform_indices = @transform_1, window_bounds = array<i64: 4, 512>}]} {
    %c0 = arith.constant 0 : index
    %c0_0 = arith.constant 0 : index
    %0 = vector.load %arg1[%c0, %c0_0] : memref<4x512xf32, #tpu.memory_space<vmem>>, vector<4x512xf32>
    %cst = arith.constant 1.500000e+00 : f32
    %1 = vector.broadcast %cst : f32 to vector<4x512xf32>
    %2 = arith.mulf %0, %1 : vector<4x512xf32>
    %cst_1 = arith.constant -2.500000e-01 : f32
    %3 = vector.broadcast %cst_1 : f32 to vector<4x512xf32>
    %4 = arith.addf %2, %3 : vector<4x512xf32>
    %c0_2 = arith.constant 0 : index
    %c0_3 = arith.constant 0 : index
    %5 = vector.load %arg2[%c0_2, %c0_3] : memref<4x512xf32, #tpu.memory_space<vmem>>, vector<4x512xf32>
    tpu.vector_store %arg2[%c0_2, %c0_3], %4 {strides = array<i32>} : memref<4x512xf32, #tpu.memory_space<vmem>>, vector<4x512xf32>,
    return
  }
  func.func @transform_0(%arg0: i32) -> (i32, i32) {
    %c0_i32 = arith.constant 0 : i32
    %c0_i32_0 = arith.constant 0 : i32
    return %arg0, %c0_i32 : i32, i32
  }
  func.func @transform_1(%arg0: i32) -> (i32, i32) {
    %c0_i32 = arith.constant 0 : i32
    %c0_i32_0 = arith.constant 0 : i32
    return %arg0, %c0_i32 : i32, i32
  }
}

</mosaic_0001>

<llo_original>
// kernel: _apply_fn_impl.1
$region0: #{_apply_fn_impl.1}
  #allocation0 [shape = 'u32[]', space=smem, size = 0x4, offset = 0x4, fixed_abs, tag = 'smem constant byte address 0x4 - core index']
  #allocation1 [shape = 'u32[144,128]{1,0:T(1,128)}', space=vmem, size = 0x12000, scoped, tag = 'internal scratch']
  %s0 = inlined_call_operand.vmem [shape: f32[4,512], index: 0, kind: input, shape index: {}]
  %s1 = inlined_call_operand.vmem [shape: f32[4,512], index: 1, kind: output, shape index: {}]
  %s2 = sld [smem:[#allocation0]]
  $region14: #{_apply_fn_impl.1} parent=0
    _
  %s4 = ssub.s32 1, %s2
  %s5 = scalar_select 0, %s4, %s2
  // Predicated region
  $region2: #{_apply_fn_impl.1} parent=0 // pred_check
    _
  $region3: #{_apply_fn_impl.1} parent=0 // pred_check_branch
    %7 = sbr.rel (0) target = $region5
  $region4: #{_apply_fn_impl.1} parent=0 // pred_region
    _
  $region5: #{_apply_fn_impl.1} parent=0 // pred_fallthru
    _
  %v8 = vld [vmem:[%s0] sm:$0xff]
  %v9 = vld [vmem:[%s0 + $0x8] sm:$0xff]
  %v10 = vmul.f32 %v8, 1.5
  %v11 = vmul.f32 %v9, 1.5
  %v12 = vadd.f32 %v10, -0.25
  %v13 = vadd.f32 %v11, -0.25
  %14 = vst [vmem:[%s1] sm:$0xff] %v12
  %15 = vst [vmem:[%s1 + $0x8] sm:$0xff] %v13
  // Predicated region
  $region6: #{_apply_fn_impl.1} parent=0 // pred_check
    _
  $region7: #{_apply_fn_impl.1} parent=0 // pred_check_branch
    %17 = sbr.rel (0) target = $region9
  $region8: #{_apply_fn_impl.1} parent=0 // pred_region
    _
  $region9: #{_apply_fn_impl.1} parent=0 // pred_fallthru
    _
  // Predicated region
  $region10: #{_apply_fn_impl.1} parent=0 // pred_check
    _
  $region11: #{_apply_fn_impl.1} parent=0 // pred_check_branch
    %19 = sbr.rel (0) target = $region13
  $region12: #{_apply_fn_impl.1} parent=0 // pred_region
    _
  $region13: #{_apply_fn_impl.1} parent=0 // pred_fallthru
    _

</llo_original>
